<compile_context>
chip_gen: v5e
topology: v5e:2x2
jax: 0.10.0
libtpu: 0.0.40
codegen_flags: <defaults>
</compile_context>

<pallas_src>
import jax
import jax.numpy as jnp
from jax import lax
from jax.experimental import pallas as pl
from jax.experimental.pallas import tpu as pltpu


# --------------------------------------------------------------------------
# Kernel 1: tiny-shape path. One pallas_call, no grid; all stacked weights
# resident in VMEM; layers chained with an unrolled fori_loop.
# --------------------------------------------------------------------------
def _adalora_loop_kernel(w_ref, u_ref, ev_ref, x_ref, o_ref):
    num_layers = w_ref.shape[0]

    def layer_body(l, act):
        # TODO(synk): nn.Dropout on Wx is identity in eval mode; training-mode
        # dropout is not modeled.
        wx = jnp.dot(w_ref[l], act.astype(w_ref.dtype),
                     preferred_element_type=jnp.float32)          # (H, Bp)
        evx = jnp.dot(ev_ref[l], act, preferred_element_type=jnp.float32)  # (r, Bp)
        return wx + jnp.dot(u_ref[l], evx, preferred_element_type=jnp.float32)

    act = lax.fori_loop(0, num_layers, layer_body,
                        x_ref[...].astype(jnp.float32), unroll=True)
    o_ref[...] = act.astype(o_ref.dtype)


# --------------------------------------------------------------------------
# Kernel 2: general path. grid=(num_layers,) ("arbitrary": sequential dependency);
# per-layer W/U/EV streamed; the resident output block is the activation.
# --------------------------------------------------------------------------
def _adalora_grid_kernel(w_ref, u_ref, ev_ref, x_ref, o_ref):
    layer = pl.program_id(0)

    @pl.when(layer == 0)
    def _init():
        o_ref[...] = x_ref[...]          # load the input activation once

    act = o_ref[...]                      # (H, Bp), f32 accumulator / activation
    wx = jnp.dot(w_ref[...], act.astype(w_ref.dtype),
                 preferred_element_type=jnp.float32)              # (H, Bp)
    evx = jnp.dot(ev_ref[...], act, preferred_element_type=jnp.float32)    # (r, Bp)
    # TODO(synk): dropout on Wx modeled as identity (eval mode).
    o_ref[...] = wx + jnp.dot(u_ref[...], evx, preferred_element_type=jnp.float32)


def adalora_transformer_forward(layer_params, x, *,
                                weight_dtype=jnp.float32,
                                lane=128,
                                force_grid=False):
    """Fused AdaLoRATransformer.forward.

    x layout is (features, batch), matching the PyTorch `W @ x` convention.
    """
    num_layers = len(layer_params)
    H, B = x.shape

    # The chained design needs a single square activation buffer.
    for p in layer_params:
        assert p["w"].shape == (H, H), (
            "chained AdaLoRALinear layers require out_dim == in_dim == hidden")
        assert p["u"].shape[0] == H and p["v"].shape[1] == H
    r = layer_params[0]["u"].shape[1]

    # Constant folding (params are constant w.r.t. x), done once in the wrapper:
    #   EV  = E * V        : (r, H)
    #   U_s = scaling * U  : (H, r)
    # W may be narrowed (bf16); U/EV stay f32 (negligible bytes, keep precision).
    w_stk = jnp.stack([p["w"] for p in layer_params]).astype(weight_dtype)        # (L,H,H)
    u_stk = jnp.stack([p["scaling"] * p["u"] for p in layer_params]).astype(jnp.float32)  # (L,H,r)
    ev_stk = jnp.stack([p["e"] * p["v"] for p in layer_params]).astype(jnp.float32)        # (L,r,H)

    # Lane-dense activation/output: pad batch (last dim) to a multiple of 128.
    # Exact because the layers are bias-free linear maps (padded columns stay 0).
    bp = ((B + lane - 1) // lane) * lane
    x_pad = jnp.pad(x.astype(jnp.float32), ((0, 0), (0, bp - B)))

    # VMEM footprint if everything (all layers' weights + x + out) sits resident.
    w_itemsize = jnp.dtype(weight_dtype).itemsize
    resident_bytes = (w_stk.size * w_itemsize
                      + (u_stk.size + ev_stk.size) * 4
                      + 2 * H * bp * 4)
    use_loop = (not force_grid) and resident_bytes <= (8 << 20)

    if use_loop:
        # Single invocation: no per-grid-step overhead; LLO schedules across layers.
        out_pad = pl.pallas_call(
            _adalora_loop_kernel,
            out_shape=jax.ShapeDtypeStruct((H, bp), jnp.float32),
        )(w_stk, u_stk, ev_stk, x_pad)
    else:
        out_pad = pl.pallas_call(
            _adalora_grid_kernel,
            out_shape=jax.ShapeDtypeStruct((H, bp), jnp.float32),
            grid_spec=pltpu.PrefetchScalarGridSpec(
                num_scalar_prefetch=0,
                grid=(num_layers,),
                in_specs=[
                    # Squeezed (None) leading layer dim -> kernel sees 2-D operands.
                    pl.BlockSpec((None, H, H), lambda l: (l, 0, 0)),   # W   (per layer)
                    pl.BlockSpec((None, H, r), lambda l: (l, 0, 0)),   # U_s (per layer)
                    pl.BlockSpec((None, r, H), lambda l: (l, 0, 0)),   # EV  (per layer)
                    pl.BlockSpec((H, bp), lambda l: (0, 0)),           # x   (resident)
                ],
                # Constant index map -> VMEM-resident output == activation accumulator.
                out_specs=pl.BlockSpec((H, bp), lambda l: (0, 0)),
            ),
            compiler_params=pltpu.CompilerParams(
                dimension_semantics=("arbitrary",),    # layers are sequential
            ),
        )(w_stk, u_stk, ev_stk, x_pad)

    return out_pad[:, :B].astype(x.dtype)


def adalora_transformer_reference(layer_params, x):
    """Pure-JAX reference mirroring the PyTorch forward exactly (f32)."""
    for p in layer_params:
        uev = jnp.matmul(p["u"], p["e"] * p["v"]) * p["scaling"]
        x = jnp.matmul(p["w"], x) + jnp.matmul(uev, x)
    return x


def make_params(key, num_layers, hidden, r, alpha):
    """Deterministic synthetic parameters.

    Shapes follow the module __init__:
      pretrained_weight W : (out_dim, in_dim)
      lora_U             : (out_dim, r)   ~ N(0, 0.02)
      lora_E             : (r, 1)         (zero-init in __init__; drawn small &
                                           nonzero here so the LoRA path is exercised)
      lora_V             : (r, in_dim)    ~ N(0, 0.02)
    """
    scaling = float(alpha) if alpha > 0 else float(r)
    params = []
    for _ in range(num_layers):
        kw, ku, ke, kv, key = jax.random.split(key, 5)
        params.append({
            "w": 0.02 * jax.random.normal(kw, (hidden, hidden), jnp.float32),
            "u": 0.02 * jax.random.normal(ku, (hidden, r), jnp.float32),
            "e": 0.02 * jax.random.normal(ke, (r, 1), jnp.float32),
            "v": 0.02 * jax.random.normal(kv, (r, hidden), jnp.float32),
            "scaling": scaling,
        })
    return params


if __name__ == "__main__":
    hidden = 32      # in_features == out_features so layers chain under `W @ x`
    batch = 8
    r = 8
    alpha = 1
    num_layers = 3

    key = jax.random.PRNGKey(0)
    kp, kx = jax.random.split(key)
    params = make_params(kp, num_layers, hidden, r, alpha)
    x = jax.random.normal(kx, (hidden, batch), jnp.float32)   # (features, batch)

    ref = adalora_transformer_reference(params, x)

    # 1) Single-invocation (fori_loop) path, f32 weights: exact-ish agreement.
    out_loop = jax.block_until_ready(
        adalora_transformer_forward(params, x, weight_dtype=jnp.float32))
    assert out_loop.shape == (hidden, batch)
    assert jnp.allclose(out_loop, ref, atol=1e-5, rtol=1e-5), "loop/f32 mismatch"

    # 2) Grid-over-layers path, f32 weights.
    out_grid = jax.block_until_ready(
        adalora_transformer_forward(params, x, weight_dtype=jnp.float32,
                                    force_grid=True))
    assert jnp.allclose(out_grid, ref, atol=1e-5, rtol=1e-5), "grid/f32 mismatch"

    # 3) bf16-weight variants (HBM-bandwidth optimization); looser tolerance vs f32 ref.
    out_loop_bf16 = jax.block_until_ready(
        adalora_transformer_forward(params, x, weight_dtype=jnp.bfloat16))
    assert jnp.allclose(out_loop_bf16, ref, atol=5e-4, rtol=5e-2), "loop/bf16 mismatch"

    out_grid_bf16 = jax.block_until_ready(
        adalora_transformer_forward(params, x, weight_dtype=jnp.bfloat16,
                                    force_grid=True))
    assert jnp.allclose(out_grid_bf16, ref, atol=5e-4, rtol=5e-2), "grid/bf16 mismatch"

    print("KERNEL_OK")
</pallas_src>

<mosaic_0001>
module attributes {stable_mosaic.version = 11 : i64} {
  func.func @_adalora_loop_kernel(%arg0: memref<3x32x32xf32, #tpu.memory_space<vmem>>, %arg1: memref<3x32x8xf32, #tpu.memory_space<vmem>>, %arg2: memref<3x8x32xf32, #tpu.memory_space<vmem>>, %arg3: memref<32x128xf32, #tpu.memory_space<vmem>>, %arg4: memref<32x128xf32, #tpu.memory_space<vmem>>) attributes {dimension_semantics = [], scalar_prefetch = 0 : i64, scratch_operands = 0 : i64, tpu.core_type = #tpu.core_type<tc>} {
    %c0 = arith.constant 0 : index
    %c0_0 = arith.constant 0 : index
    %0 = vector.load %arg3[%c0, %c0_0] : memref<32x128xf32, #tpu.memory_space<vmem>>, vector<32x128xf32>
    %c0_i32 = arith.constant 0 : i32
    %1 = arith.index_cast %c0_i32 : i32 to index
    %c0_1 = arith.constant 0 : index
    %c0_2 = arith.constant 0 : index
    %2 = vector.load %arg0[%1, %c0_1, %c0_2] : memref<3x32x32xf32, #tpu.memory_space<vmem>>, vector<1x32x32xf32>
    %3 = vector.shape_cast %2 : vector<1x32x32xf32> to vector<32x32xf32>
    %cst = arith.constant dense<0.000000e+00> : vector<32x128xf32>
    %4 = tpu.matmul %3, %0, %cst {dimension_numbers = #tpu.dot_dimension_numbers<[1], [0], [0], [1], [0, 0, 1, 1], [], []>} : vector<32x32xf32>, vector<32x128xf32>, vector<32x128xf32> -> vector<32x128xf32>
    %5 = arith.index_cast %c0_i32 : i32 to index
    %c0_3 = arith.constant 0 : index
    %c0_4 = arith.constant 0 : index
    %6 = vector.load %arg2[%5, %c0_3, %c0_4] : memref<3x8x32xf32, #tpu.memory_space<vmem>>, vector<1x8x32xf32>
    %7 = vector.shape_cast %6 : vector<1x8x32xf32> to vector<8x32xf32>
    %cst_5 = arith.constant dense<0.000000e+00> : vector<8x128xf32>
    %8 = tpu.matmul %7, %0, %cst_5 {dimension_numbers = #tpu.dot_dimension_numbers<[1], [0], [0], [1], [0, 0, 1, 1], [], []>} : vector<8x32xf32>, vector<32x128xf32>, vector<8x128xf32> -> vector<8x128xf32>
    %9 = arith.index_cast %c0_i32 : i32 to index
    %c0_6 = arith.constant 0 : index
    %c0_7 = arith.constant 0 : index
    %10 = vector.load %arg1[%9, %c0_6, %c0_7] : memref<3x32x8xf32, #tpu.memory_space<vmem>>, vector<1x32x8xf32>
    %11 = vector.shape_cast %10 : vector<1x32x8xf32> to vector<32x8xf32>
    %cst_8 = arith.constant dense<0.000000e+00> : vector<32x128xf32>
    %12 = tpu.matmul %11, %8, %cst_8 {dimension_numbers = #tpu.dot_dimension_numbers<[1], [0], [0], [1], [0, 0, 1, 1], [], []>} : vector<32x8xf32>, vector<8x128xf32>, vector<32x128xf32> -> vector<32x128xf32>
    %13 = arith.addf %4, %12 : vector<32x128xf32>
    %c1_i32 = arith.constant 1 : i32
    %14 = arith.index_cast %c1_i32 : i32 to index
    %c0_9 = arith.constant 0 : index
    %c0_10 = arith.constant 0 : index
    %15 = vector.load %arg0[%14, %c0_9, %c0_10] : memref<3x32x32xf32, #tpu.memory_space<vmem>>, vector<1x32x32xf32>
    %16 = vector.shape_cast %15 : vector<1x32x32xf32> to vector<32x32xf32>
    %cst_11 = arith.constant dense<0.000000e+00> : vector<32x128xf32>
    %17 = tpu.matmul %16, %13, %cst_11 {dimension_numbers = #tpu.dot_dimension_numbers<[1], [0], [0], [1], [0, 0, 1, 1], [], []>} : vector<32x32xf32>, vector<32x128xf32>, vector<32x128xf32> -> vector<32x128xf32>
    %18 = arith.index_cast %c1_i32 : i32 to index
    %c0_12 = arith.constant 0 : index
    %c0_13 = arith.constant 0 : index
    %19 = vector.load %arg2[%18, %c0_12, %c0_13] : memref<3x8x32xf32, #tpu.memory_space<vmem>>, vector<1x8x32xf32>
    %20 = vector.shape_cast %19 : vector<1x8x32xf32> to vector<8x32xf32>
    %cst_14 = arith.constant dense<0.000000e+00> : vector<8x128xf32>
    %21 = tpu.matmul %20, %13, %cst_14 {dimension_numbers = #tpu.dot_dimension_numbers<[1], [0], [0], [1], [0, 0, 1, 1], [], []>} : vector<8x32xf32>, vector<32x128xf32>, vector<8x128xf32> -> vector<8x128xf32>
    %22 = arith.index_cast %c1_i32 : i32 to index
    %c0_15 = arith.constant 0 : index
    %c0_16 = arith.constant 0 : index
    %23 = vector.load %arg1[%22, %c0_15, %c0_16] : memref<3x32x8xf32, #tpu.memory_space<vmem>>, vector<1x32x8xf32>
    %24 = vector.shape_cast %23 : vector<1x32x8xf32> to vector<32x8xf32>
    %cst_17 = arith.constant dense<0.000000e+00> : vector<32x128xf32>
    %25 = tpu.matmul %24, %21, %cst_17 {dimension_numbers = #tpu.dot_dimension_numbers<[1], [0], [0], [1], [0, 0, 1, 1], [], []>} : vector<32x8xf32>, vector<8x128xf32>, vector<32x128xf32> -> vector<32x128xf32>
    %26 = arith.addf %17, %25 : vector<32x128xf32>
    %c2_i32 = arith.constant 2 : i32
    %27 = arith.index_cast %c2_i32 : i32 to index
    %c0_18 = arith.constant 0 : index
    %c0_19 = arith.constant 0 : index
    %28 = vector.load %arg0[%27, %c0_18, %c0_19] : memref<3x32x32xf32, #tpu.memory_space<vmem>>, vector<1x32x32xf32>
    %29 = vector.shape_cast %28 : vector<1x32x32xf32> to vector<32x32xf32>
    %cst_20 = arith.constant dense<0.000000e+00> : vector<32x128xf32>
    %30 = tpu.matmul %29, %26, %cst_20 {dimension_numbers = #tpu.dot_dimension_numbers<[1], [0], [0], [1], [0, 0, 1, 1], [], []>} : vector<32x32xf32>, vector<32x128xf32>, vector<32x128xf32> -> vector<32x128xf32>
    %31 = arith.index_cast %c2_i32 : i32 to index
    %c0_21 = arith.constant 0 : index
    %c0_22 = arith.constant 0 : index
    %32 = vector.load %arg2[%31, %c0_21, %c0_22] : memref<3x8x32xf32, #tpu.memory_space<vmem>>, vector<1x8x32xf32>
    %33 = vector.shape_cast %32 : vector<1x8x32xf32> to vector<8x32xf32>
    %cst_23 = arith.constant dense<0.000000e+00> : vector<8x128xf32>
    %34 = tpu.matmul %33, %26, %cst_23 {dimension_numbers = #tpu.dot_dimension_numbers<[1], [0], [0], [1], [0, 0, 1, 1], [], []>} : vector<8x32xf32>, vector<32x128xf32>, vector<8x128xf32> -> vector<8x128xf32>
    %35 = arith.index_cast %c2_i32 : i32 to index
    %c0_24 = arith.constant 0 : index
    %c0_25 = arith.constant 0 : index
    %36 = vector.load %arg1[%35, %c0_24, %c0_25] : memref<3x32x8xf32, #tpu.memory_space<vmem>>, vector<1x32x8xf32>
    %37 = vector.shape_cast %36 : vector<1x32x8xf32> to vector<32x8xf32>
    %cst_26 = arith.constant dense<0.000000e+00> : vector<32x128xf32>
    %38 = tpu.matmul %37, %34, %cst_26 {dimension_numbers = #tpu.dot_dimension_numbers<[1], [0], [0], [1], [0, 0, 1, 1], [], []>} : vector<32x8xf32>, vector<8x128xf32>, vector<32x128xf32> -> vector<32x128xf32>
    %39 = arith.addf %30, %38 : vector<32x128xf32>
    %c3_i32 = arith.constant 3 : i32
    %c0_27 = arith.constant 0 : index
    %c0_28 = arith.constant 0 : index
    %40 = vector.load %arg4[%c0_27, %c0_28] : memref<32x128xf32, #tpu.memory_space<vmem>>, vector<32x128xf32>
    tpu.vector_store %arg4[%c0_27, %c0_28], %39 {strides = array<i32>} : memref<32x128xf32, #tpu.memory_space<vmem>>, vector<32x128xf32>,
    return
  }
}

</mosaic_0001>

<llo_original>
// kernel: tpu_custom_call.1
$region0: #{tpu_custom_call.1}
  #allocation0 [shape = 'u32[]', space=smem, size = 0x4, offset = 0x4, fixed_abs, tag = 'smem constant byte address 0x4 - core index']
  #allocation1 [shape = 'u32[72,128]{1,0:T(1,128)}', space=vmem, size = 0x9000, scoped, tag = 'internal scratch']
  %s0 = inlined_call_operand.vmem [shape: f32[3,32,32], index: 0, kind: input, shape index: {}]
  %s1 = inlined_call_operand.vmem [shape: f32[3,32,8], index: 1, kind: input, shape index: {}]
  %s2 = inlined_call_operand.vmem [shape: f32[3,8,32], index: 2, kind: input, shape index: {}]
  %s3 = inlined_call_operand.hbm [shape: f32[32,128], index: 3, kind: input, shape index: {}]
  %s4 = inlined_call_operand.hbm [shape: f32[32,128], index: 4, kind: output, shape index: {}]
  %s5 = sld [smem:[#allocation0]]
  $region30: #{tpu_custom_call.1} parent=0
    _
  %s7 = ssub.s32 1, %s5
  %s8 = scalar_select 0, %s7, %s5
  $region1: #{tpu_custom_call.1} parent=0
    #allocation2 [shape = 'u8[16384]{0}', space=vmem, size = 0x4000, scoped, tag = 'input window, operand 3, single buffered']
    #allocation3 [shape = 's32[1]{0}', space=sflag, size = 0x4, scoped, tag = 'scoped memory for tpu_custom_call.1']
    #allocation4 [shape = 's32[1]{0}', space=sflag, size = 0x4, scoped, tag = 'scoped memory for tpu_custom_call.1']
    #allocation5 [shape = 'u8[16384]{0}', space=vmem, size = 0x4000, scoped, tag = 'output window, operand 0, single buffered']
    %9 = vsyncpa [#allocation3], 0
    %10 = vsyncpa [#allocation4], 0
    // Predicated region
    $region2: #{tpu_custom_call.1} parent=1 // pred_check
      _
    $region3: #{tpu_custom_call.1} parent=1 // pred_check_branch
      %12 = sbr.rel (0) target = $region5
    $region4: #{tpu_custom_call.1} parent=1 // pred_region
      _
    $region5: #{tpu_custom_call.1} parent=1 // pred_fallthru
      _
    // Predicated region
    $region6: #{tpu_custom_call.1} parent=1 // pred_check
      _
    $region7: #{tpu_custom_call.1} parent=1 // pred_check_branch
      %14 = sbr.rel (0) target = $region9
    $region8: #{tpu_custom_call.1} parent=1 // pred_region
      _
    $region9: #{tpu_custom_call.1} parent=1 // pred_fallthru
      _
    // Predicated region
    $region10: #{tpu_custom_call.1} parent=1 // pred_check
      _
    $region11: #{tpu_custom_call.1} parent=1 // pred_check_branch
      %16 = sbr.rel (0) target = $region13
    $region12: #{tpu_custom_call.1} parent=1 // pred_region
      _
    $region13: #{tpu_custom_call.1} parent=1 // pred_fallthru
      _
    // Predicated region
    $region14: #{tpu_custom_call.1} parent=1 // pred_check
      _
    $region15: #{tpu_custom_call.1} parent=1 // pred_check_branch
      %18 = sbr.rel (0) target = $region17
    $region16: #{tpu_custom_call.1} parent=1 // pred_region
      %20 = vsyncadd [#allocation3], 0
      %s21 = sshll.u32 %s3, 4
      %s22 = int_to_ptr.hbm [resolvable:$true] %s21
      %s23 = sshll.u32 [#allocation2], 4
      %s24 = int_to_ptr.vmem [resolvable:$true] %s23
      %29 = dma.hbm_to_vmem [thread:$0]  %s22, 512, %s24, [#allocation3], 128, 128, 8
    $region17: #{tpu_custom_call.1} parent=1 // pred_fallthru
      _
    // Predicated region
    $region18: #{tpu_custom_call.1} parent=1 // pred_check
      _
    $region19: #{tpu_custom_call.1} parent=1 // pred_check_branch
      %31 = sbr.rel (0) target = $region21
    $region20: #{tpu_custom_call.1} parent=1 // pred_region
      %33 = dma.done [#allocation3], 512
    $region21: #{tpu_custom_call.1} parent=1 // pred_fallthru
      _
    %v34 = vld [vmem:[#allocation2] sm:$0xff]
    %v35 = vld [vmem:[#allocation2 + $0x8] sm:$0xff]
    %v36 = vld [vmem:[#allocation2 + $0x10] sm:$0xff]
    %v37 = vld [vmem:[#allocation2 + $0x18] sm:$0xff]
    %v38 = vld [vmem:[%s0] sm:$0xff]
    %v39 = vld [vmem:[%s0 + $0x8] sm:$0xff]
    %v40 = vld [vmem:[%s0 + $0x10] sm:$0xff]
    %v41 = vld [vmem:[%s0 + $0x18] sm:$0xff]
    %v42 = vld [vmem:[%s2] sm:$0xff]
    %vm43 = vcmask 261120
    %v45 = vsel %vm43, %v42, 0
    %47 = vmatpush.msra.mxu0 0.0
    %48 = vmatpush.msra.mxu0 0.0
    %49 = vmatpush.msra.mxu0 0.0
    %50 = vmatpush.msra.mxu0 0.0
    %51 = vmatpush.msra.mxu0 0.0
    %52 = vmatpush.msra.mxu0 0.0
    %53 = vmatpush.msra.mxu0 0.0
    %54 = vmatpush.msra.mxu0 0.0
    %55 = vmatpush.msra.mxu0 0.0
    %56 = vmatpush.msra.mxu0 0.0
    %57 = vmatpush.msra.mxu0 0.0
    %58 = vmatpush.msra.mxu0 0.0
    %59 = vmatpush.msra.mxu0 %v37
    %60 = vmatpush.msra.mxu0 %v36
    %61 = vmatpush.msra.mxu0 %v35
    %62 = vmatpush.msra.mxu0 %v34
    %63 = vmatmul.f32.gmra.mxu0 %v45
    %v64 = vpop.f32.mrf.mxu0
    %v65 = vadd.f32 0.0, %v64
    %66 = vdwg.mxu0
    %v67 = vld [vmem:[%s1] sm:$0xff]
    %v68 = vld [vmem:[%s1 + $0x8] sm:$0xff]
    %v69 = vld [vmem:[%s1 + $0x10] sm:$0xff]
    %v70 = vld [vmem:[%s1 + $0x18] sm:$0xff]
    %vm71 = vcmask 64512
    %v73 = vsel %vm71, %v67, 0
    %v76 = vsel %vm71, %v68, 0
    %v79 = vsel %vm71, %v69, 0
    %v82 = vsel %vm71, %v70, 0
    %84 = vmatpush.msra.mxu0 0.0
    %85 = vmatpush.msra.mxu0 0.0
    %86 = vmatpush.msra.mxu0 0.0
    %87 = vmatpush.msra.mxu0 0.0
    %88 = vmatpush.msra.mxu0 0.0
    %89 = vmatpush.msra.mxu0 0.0
    %90 = vmatpush.msra.mxu0 0.0
    %91 = vmatpush.msra.mxu0 0.0
    %92 = vmatpush.msra.mxu0 0.0
    %93 = vmatpush.msra.mxu0 0.0
    %94 = vmatpush.msra.mxu0 0.0
    %95 = vmatpush.msra.mxu0 0.0
    %96 = vmatpush.msra.mxu0 0.0
    %97 = vmatpush.msra.mxu0 0.0
    %98 = vmatpush.msra.mxu0 0.0
    %99 = vmatpush.msra.mxu0 %v65
    %100 = vmatmul.f32.gmra.mxu0 %v73
    %v101 = vpop.f32.mrf.mxu0
    %v102 = vadd.f32 0.0, %v101
    %103 = vmatmul.f32.gmra.mxu0 %v76
    %v104 = vpop.f32.mrf.mxu0
    %v105 = vadd.f32 0.0, %v104
    %106 = vmatmul.f32.gmra.mxu0 %v79
    %v107 = vpop.f32.mrf.mxu0
    %v108 = vadd.f32 0.0, %v107
    %109 = vmatmul.f32.gmra.mxu0 %v82
    %v110 = vpop.f32.mrf.mxu0
    %v111 = vadd.f32 0.0, %v110
    %112 = vdwg.mxu0
    %v114 = vsel %vm43, %v38, 0
    %v117 = vsel %vm43, %v39, 0
    %v120 = vsel %vm43, %v40, 0
    %v123 = vsel %vm43, %v41, 0
    %125 = vmatpush.msra.mxu0 0.0
    %126 = vmatpush.msra.mxu0 0.0
    %127 = vmatpush.msra.mxu0 0.0
    %128 = vmatpush.msra.mxu0 0.0
    %129 = vmatpush.msra.mxu0 0.0
    %130 = vmatpush.msra.mxu0 0.0
    %131 = vmatpush.msra.mxu0 0.0
    %132 = vmatpush.msra.mxu0 0.0
    %133 = vmatpush.msra.mxu0 0.0
    %134 = vmatpush.msra.mxu0 0.0
    %135 = vmatpush.msra.mxu0 0.0
    %136 = vmatpush.msra.mxu0 0.0
    %137 = vmatpush.msra.mxu0 %v37
    %138 = vmatpush.msra.mxu0 %v36
    %139 = vmatpush.msra.mxu0 %v35
    %140 = vmatpush.msra.mxu0 %v34
    %141 = vmatmul.f32.gmra.mxu0 %v114
    %v142 = vpop.f32.mrf.mxu0
    %v143 = vadd.f32 %v102, %v142
    %144 = vmatmul.f32.gmra.mxu0 %v117
    %v145 = vpop.f32.mrf.mxu0
    %v146 = vadd.f32 %v105, %v145
    %147 = vmatmul.f32.gmra.mxu0 %v120
    %v148 = vpop.f32.mrf.mxu0
    %v149 = vadd.f32 %v108, %v148
    %150 = vmatmul.f32.gmra.mxu0 %v123
    %v151 = vpop.f32.mrf.mxu0
    %v152 = vadd.f32 %v111, %v151
    %153 = vdwg.mxu0
    %s154 = scalar_lea.vmem %s0, 32
    %v155 = vld [vmem:[%s154] sm:$0xff]
    %v156 = vld [vmem:[%s154 + $0x8] sm:$0xff]
    %v157 = vld [vmem:[%s154 + $0x10] sm:$0xff]
    %v158 = vld [vmem:[%s154 + $0x18] sm:$0xff]
    %s159 = scalar_lea.vmem %s2, 8
    %v160 = vld [vmem:[%s159] sm:$0xff]
    %v162 = vsel %vm43, %v160, 0
    %164 = vmatpush.msra.mxu0 0.0
    %165 = vmatpush.msra.mxu0 0.0
    %166 = vmatpush.msra.mxu0 0.0
    %167 = vmatpush.msra.mxu0 0.0
    %168 = vmatpush.msra.mxu0 0.0
    %169 = vmatpush.msra.mxu0 0.0
    %170 = vmatpush.msra.mxu0 0.0
    %171 = vmatpush.msra.mxu0 0.0
    %172 = vmatpush.msra.mxu0 0.0
    %173 = vmatpush.msra.mxu0 0.0
    %174 = vmatpush.msra.mxu0 0.0
    %175 = vmatpush.msra.mxu0 0.0
    %176 = vmatpush.msra.mxu0 %v152
    %177 = vmatpush.msra.mxu0 %v149
    %178 = vmatpush.msra.mxu0 %v146
    %179 = vmatpush.msra.mxu0 %v143
    %180 = vmatmul.f32.gmra.mxu0 %v162
    %v181 = vpop.f32.mrf.mxu0
    %v182 = vadd.f32 0.0, %v181
    %183 = vdwg.mxu0
    %s184 = scalar_lea.vmem %s1, 32
    %v185 = vld [vmem:[%s184] sm:$0xff]
    %v186 = vld [vmem:[%s184 + $0x8] sm:$0xff]
    %v187 = vld [vmem:[%s184 + $0x10] sm:$0xff]
    %v188 = vld [vmem:[%s184 + $0x18] sm:$0xff]
    %v190 = vsel %vm71, %v185, 0
    %v193 = vsel %vm71, %v186, 0
    %v196 = vsel %vm71, %v187, 0
    %v199 = vsel %vm71, %v188, 0
    %201 = vmatpush.msra.mxu0 0.0
    %202 = vmatpush.msra.mxu0 0.0
    %203 = vmatpush.msra.mxu0 0.0
    %204 = vmatpush.msra.mxu0 0.0
    %205 = vmatpush.msra.mxu0 0.0
    %206 = vmatpush.msra.mxu0 0.0
    %207 = vmatpush.msra.mxu0 0.0
    %208 = vmatpush.msra.mxu0 0.0
    %209 = vmatpush.msra.mxu0 0.0
    %210 = vmatpush.msra.mxu0 0.0
    %211 = vmatpush.msra.mxu0 0.0
    %212 = vmatpush.msra.mxu0 0.0
    %213 = vmatpush.msra.mxu0 0.0
    %214 = vmatpush.msra.mxu0 0.0
    %215 = vmatpush.msra.mxu0 0.0
    %216 = vmatpush.msra.mxu0 %v182
    %217 = vmatmul.f32.gmra.mxu0 %v190
    %v218 = vpop.f32.mrf.mxu0
    %v219 = vadd.f32 0.0, %v218
    %220 = vmatmul.f32.gmra.mxu0 %v193
    %v221 = vpop.f32.mrf.mxu0
    %v222 = vadd.f32 0.0, %v221
    %223 = vmatmul.f32.gmra.mxu0 %v196
    %v224 = vpop.f32.mrf.mxu0
    %v225 = vadd.f32 0.0, %v224
    %226 = vmatmul.f32.gmra.mxu0 %v199
    %v227 = vpop.f32.mrf.mxu0
    %v228 = vadd.f32 0.0, %v227
    %229 = vdwg.mxu0
    %v231 = vsel %vm43, %v155, 0
    %v234 = vsel %vm43, %v156, 0
    %v237 = vsel %vm43, %v157, 0
    %v240 = vsel %vm43, %v158, 0
    %242 = vmatpush.msra.mxu0 0.0
    %243 = vmatpush.msra.mxu0 0.0
    %244 = vmatpush.msra.mxu0 0.0
    %245 = vmatpush.msra.mxu0 0.0
    %246 = vmatpush.msra.mxu0 0.0
    %247 = vmatpush.msra.mxu0 0.0
    %248 = vmatpush.msra.mxu0 0.0
    %249 = vmatpush.msra.mxu0 0.0
    %250 = vmatpush.msra.mxu0 0.0
    %251 = vmatpush.msra.mxu0 0.0
    %252 = vmatpush.msra.mxu0 0.0
    %253 = vmatpush.msra.mxu0 0.0
    %254 = vmatpush.msra.mxu0 %v152
    %255 = vmatpush.msra.mxu0 %v149
    %256 = vmatpush.msra.mxu0 %v146
    %257 = vmatpush.msra.mxu0 %v143
    %258 = vmatmul.f32.gmra.mxu0 %v231
    %v259 = vpop.f32.mrf.mxu0
    %v260 = vadd.f32 %v219, %v259
    %261 = vmatmul.f32.gmra.mxu0 %v234
    %v262 = vpop.f32.mrf.mxu0
    %v263 = vadd.f32 %v222, %v262
    %264 = vmatmul.f32.gmra.mxu0 %v237
    %v265 = vpop.f32.mrf.mxu0
    %v266 = vadd.f32 %v225, %v265
    %267 = vmatmul.f32.gmra.mxu0 %v240
    %v268 = vpop.f32.mrf.mxu0
    %v269 = vadd.f32 %v228, %v268
    %270 = vdwg.mxu0
    %s271 = scalar_lea.vmem %s0, 64
    %v272 = vld [vmem:[%s271] sm:$0xff]
    %v273 = vld [vmem:[%s271 + $0x8] sm:$0xff]
    %v274 = vld [vmem:[%s271 + $0x10] sm:$0xff]
    %v275 = vld [vmem:[%s271 + $0x18] sm:$0xff]
    %s276 = scalar_lea.vmem %s2, 16
    %v277 = vld [vmem:[%s276] sm:$0xff]
    %v279 = vsel %vm43, %v277, 0
    %281 = vmatpush.msra.mxu0 0.0
    %282 = vmatpush.msra.mxu0 0.0
    %283 = vmatpush.msra.mxu0 0.0
    %284 = vmatpush.msra.mxu0 0.0
    %285 = vmatpush.msra.mxu0 0.0
    %286 = vmatpush.msra.mxu0 0.0
    %287 = vmatpush.msra.mxu0 0.0
    %288 = vmatpush.msra.mxu0 0.0
    %289 = vmatpush.msra.mxu0 0.0
    %290 = vmatpush.msra.mxu0 0.0
    %291 = vmatpush.msra.mxu0 0.0
    %292 = vmatpush.msra.mxu0 0.0
    %293 = vmatpush.msra.mxu0 %v269
    %294 = vmatpush.msra.mxu0 %v266
    %295 = vmatpush.msra.mxu0 %v263
    %296 = vmatpush.msra.mxu0 %v260
    %297 = vmatmul.f32.gmra.mxu0 %v279
    %v298 = vpop.f32.mrf.mxu0
    %v299 = vadd.f32 0.0, %v298
    %300 = vdwg.mxu0
    %s301 = scalar_lea.vmem %s1, 64
    %v302 = vld [vmem:[%s301] sm:$0xff]
    %v303 = vld [vmem:[%s301 + $0x8] sm:$0xff]
    %v304 = vld [vmem:[%s301 + $0x10] sm:$0xff]
    %v305 = vld [vmem:[%s301 + $0x18] sm:$0xff]
    %v307 = vsel %vm71, %v302, 0
    %v310 = vsel %vm71, %v303, 0
    %v313 = vsel %vm71, %v304, 0
    %v316 = vsel %vm71, %v305, 0
    %318 = vmatpush.msra.mxu0 0.0
    %319 = vmatpush.msra.mxu0 0.0
    %320 = vmatpush.msra.mxu0 0.0
    %321 = vmatpush.msra.mxu0 0.0
    %322 = vmatpush.msra.mxu0 0.0
    %323 = vmatpush.msra.mxu0 0.0
    %324 = vmatpush.msra.mxu0 0.0
    %325 = vmatpush.msra.mxu0 0.0
    %326 = vmatpush.msra.mxu0 0.0
    %327 = vmatpush.msra.mxu0 0.0
    %328 = vmatpush.msra.mxu0 0.0
    %329 = vmatpush.msra.mxu0 0.0
    %330 = vmatpush.msra.mxu0 0.0
    %331 = vmatpush.msra.mxu0 0.0
    %332 = vmatpush.msra.mxu0 0.0
    %333 = vmatpush.msra.mxu0 %v299
    %334 = vmatmul.f32.gmra.mxu0 %v307
    %v335 = vpop.f32.mrf.mxu0
    %v336 = vadd.f32 0.0, %v335
    %337 = vmatmul.f32.gmra.mxu0 %v310
    %v338 = vpop.f32.mrf.mxu0
    %v339 = vadd.f32 0.0, %v338
    %340 = vmatmul.f32.gmra.mxu0 %v313
    %v341 = vpop.f32.mrf.mxu0
    %v342 = vadd.f32 0.0, %v341
    %343 = vmatmul.f32.gmra.mxu0 %v316
    %v344 = vpop.f32.mrf.mxu0
    %v345 = vadd.f32 0.0, %v344
    %346 = vdwg.mxu0
    %v348 = vsel %vm43, %v272, 0
    %v351 = vsel %vm43, %v273, 0
    %v354 = vsel %vm43, %v274, 0
    %v357 = vsel %vm43, %v275, 0
    %359 = vmatpush.msra.mxu0 0.0
    %360 = vmatpush.msra.mxu0 0.0
    %361 = vmatpush.msra.mxu0 0.0
    %362 = vmatpush.msra.mxu0 0.0
    %363 = vmatpush.msra.mxu0 0.0
    %364 = vmatpush.msra.mxu0 0.0
    %365 = vmatpush.msra.mxu0 0.0
    %366 = vmatpush.msra.mxu0 0.0
    %367 = vmatpush.msra.mxu0 0.0
    %368 = vmatpush.msra.mxu0 0.0
    %369 = vmatpush.msra.mxu0 0.0
    %370 = vmatpush.msra.mxu0 0.0
    %371 = vmatpush.msra.mxu0 %v269
    %372 = vmatpush.msra.mxu0 %v266
    %373 = vmatpush.msra.mxu0 %v263
    %374 = vmatpush.msra.mxu0 %v260
    %375 = vmatmul.f32.gmra.mxu0 %v348
    %v376 = vpop.f32.mrf.mxu0
    %v377 = vadd.f32 %v336, %v376
    %378 = vmatmul.f32.gmra.mxu0 %v351
    %v379 = vpop.f32.mrf.mxu0
    %v380 = vadd.f32 %v339, %v379
    %381 = vmatmul.f32.gmra.mxu0 %v354
    %v382 = vpop.f32.mrf.mxu0
    %v383 = vadd.f32 %v342, %v382
    %384 = vmatmul.f32.gmra.mxu0 %v357
    %v385 = vpop.f32.mrf.mxu0
    %v386 = vadd.f32 %v345, %v385
    %387 = vdwg.mxu0
    %388 = vst [vmem:[#allocation5] sm:$0xff] %v377
    %389 = vst [vmem:[#allocation5 + $0x8] sm:$0xff] %v380
    %390 = vst [vmem:[#allocation5 + $0x10] sm:$0xff] %v383
    %391 = vst [vmem:[#allocation5 + $0x18] sm:$0xff] %v386
    // Predicated region
    $region22: #{tpu_custom_call.1} parent=1 // pred_check
      _
    $region23: #{tpu_custom_call.1} parent=1 // pred_check_branch
      %393 = sbr.rel (0) target = $region25
    $region24: #{tpu_custom_call.1} parent=1 // pred_region
      %395 = vsyncadd [#allocation4], 0
      %s396 = sshll.u32 [#allocation5], 4
      %s397 = int_to_ptr.vmem [resolvable:$true] %s396
      %s398 = sshll.u32 %s4, 4
      %s399 = int_to_ptr.hbm [resolvable:$true] %s398
      %404 = dma.vmem_to_hbm [thread:$0]  %s397, 512, %s399, [#allocation4], 128, 128, 8
    $region25: #{tpu_custom_call.1} parent=1 // pred_fallthru
      _
    // Predicated region
    $region26: #{tpu_custom_call.1} parent=1 // pred_check
      _
    $region27: #{tpu_custom_call.1} parent=1 // pred_check_branch
      %406 = sbr.rel (0) target = $region29
    $region28: #{tpu_custom_call.1} parent=1 // pred_region
      %408 = dma.done [#allocation4], 512
    $region29: #{tpu_custom_call.1} parent=1 // pred_fallthru
      _
    %409 = vsyncpa [#allocation3], 1
    %410 = vsyncpa [#allocation4], 1

</llo_original>
